<compile_context>
chip_gen: v7x
topology: tpu7x:2x2x1
jax: 0.10.0
libtpu: 0.0.40
codegen_flags: <defaults>
</compile_context>

<pallas_src>
import functools

import jax
import jax.numpy as jnp
from jax.experimental import pallas as pl
from jax.experimental.pallas import tpu as pltpu

# Keep both weight matrices fully VMEM-resident only if they fit under ~24 MiB
# (safe for v7x's ~32 MiB scoped default); otherwise stream w1 over a K axis.
_DEFAULT_WEIGHT_BUDGET = 24 << 20


def _cdiv(a, b):
    return (a + b - 1) // b


def _round_up(n, m):
    return _cdiv(n, m) * m


# ----------------------------------------------------------------- kernels

def _leaky_relu(h):
    return jnp.where(h >= 0.0, h, 0.01 * h)


def _generator_kernel_resident(x_ref, w1_ref, b1_ref, w2_ref, b2_ref, o_ref):
    """Both weights VMEM-resident; one batch tile per grid step."""
    # Hidden layer on the MXU with f32 accumulation; x is cast to the weight
    # dtype here so the wrapper never makes a separate pad/cast pass over x.
    h = jnp.dot(x_ref[...].astype(w1_ref.dtype), w1_ref[...],
                preferred_element_type=jnp.float32)
    h = _leaky_relu(h + b1_ref[...])          # bias + LeakyReLU in f32 (VPU)
    # Dropout: identity at inference (nn.Dropout is a no-op in eval()).
    # TODO(synk): training-mode dropout would use pltpu.prng_seed + prng_random_bits.
    y = jnp.dot(h.astype(w2_ref.dtype), w2_ref[...],
                preferred_element_type=jnp.float32)
    o_ref[...] = jnp.tanh(y + b2_ref[...]).astype(o_ref.dtype)


def _generator_kernel_ktiled(x_ref, w1_ref, b1_ref, w2_ref, b2_ref, o_ref, h_acc):
    """w1 streamed over a K (in_dim) reduction axis; hidden accumulates in f32 scratch."""
    k = pl.program_id(1)

    @pl.when(k == 0)
    def _():
        h_acc[...] = jnp.zeros_like(h_acc)

    h_acc[...] += jnp.dot(x_ref[...].astype(w1_ref.dtype), w1_ref[...],
                          preferred_element_type=jnp.float32)

    @pl.when(k == pl.num_programs(1) - 1)
    def _():
        h = _leaky_relu(h_acc[...] + b1_ref[...])
        # Dropout: identity at inference.
        y = jnp.dot(h.astype(w2_ref.dtype), w2_ref[...],
                    preferred_element_type=jnp.float32)
        o_ref[...] = jnp.tanh(y + b2_ref[...]).astype(o_ref.dtype)


# ----------------------------------------------------------- padding / params

def _plan_feature_padding(in_dim, n_hidden, out_dim, weight_itemsize,
                          weight_budget_bytes):
    """Lane-dense (x128) feature padding + K-tiling decision for w1 residency."""
    n_hidden_p = _round_up(n_hidden, 128)
    out_dim_p = _round_up(out_dim, 128)
    in_dim_p = _round_up(in_dim, 128)
    w1_bytes = in_dim_p * n_hidden_p * weight_itemsize
    w2_bytes = n_hidden_p * out_dim_p * weight_itemsize
    if w1_bytes + w2_bytes <= weight_budget_bytes:
        tk = in_dim_p                                    # fully resident weights
    else:
        # Stream w1 over K so its double-buffered tile plus resident w2 fit.
        # TODO(synk): also tile w2's out_dim when w2 alone exceeds the budget.
        avail = max(weight_budget_bytes - w2_bytes, 0)
        tk = (avail // (2 * n_hidden_p * weight_itemsize)) // 128 * 128
        tk = int(min(in_dim_p, max(128, tk)))
        in_dim_p = _round_up(in_dim_p, tk)
    return in_dim_p, n_hidden_p, out_dim_p, tk, in_dim_p // tk


def prepare_generator_params(w1, b1, w2, b2, *, matmul_dtype=jnp.bfloat16,
                             weight_budget_bytes=_DEFAULT_WEIGHT_BUDGET):
    """Pad + cast parameters ONCE (outside the per-step forward) so every call
    does not re-read the f32 weights from HBM just to emit a bf16 copy."""
    in_dim, n_hidden = w1.shape
    out_dim = w2.shape[1]
    itemsize = jnp.dtype(matmul_dtype).itemsize
    in_dim_p, n_hidden_p, out_dim_p, _, _ = _plan_feature_padding(
        in_dim, n_hidden, out_dim, itemsize, weight_budget_bytes)
    w1_p = jnp.pad(w1, ((0, in_dim_p - in_dim),
                        (0, n_hidden_p - n_hidden))).astype(matmul_dtype)
    w2_p = jnp.pad(w2, ((0, n_hidden_p - n_hidden),
                        (0, out_dim_p - out_dim))).astype(matmul_dtype)
    b1_p = jnp.pad(b1, (0, n_hidden_p - n_hidden)).reshape(1, n_hidden_p).astype(jnp.float32)
    b2_p = jnp.pad(b2, (0, out_dim_p - out_dim)).reshape(1, out_dim_p).astype(jnp.float32)
    return w1_p, b1_p, w2_p, b2_p


# ----------------------------------------------------------------- forward

@functools.partial(jax.jit,
                   static_argnames=("out_dim", "block_m", "out_dtype",
                                    "weight_budget_bytes"))
def generator_forward(x, w1_p, b1_p, w2_p, b2_p, *, out_dim, block_m=512,
                      out_dtype=jnp.float32,
                      weight_budget_bytes=_DEFAULT_WEIGHT_BUDGET):
    """x: [bs, in_dim]; padded params from prepare_generator_params.
    Returns [bs, out_dim] in out_dtype."""
    bs, in_dim = x.shape
    in_dim_p, n_hidden_p = w1_p.shape
    out_dim_p = w2_p.shape[1]
    w_itemsize = jnp.dtype(w1_p.dtype).itemsize

    plan = _plan_feature_padding(in_dim_p, n_hidden_p, out_dim_p,
                                 w_itemsize, weight_budget_bytes)
    assert plan[:3] == (in_dim_p, n_hidden_p, out_dim_p), (
        "padded params do not match weight_budget_bytes; re-run "
        "prepare_generator_params with the same budget")
    tk, k_steps = plan[3], plan[4]

    # Batch tile: fewest row tiles of size <= block_m (minimises pad rows),
    # rounded to 8 sublanes ...
    tm = _round_up(_cdiv(bs, _cdiv(bs, block_m)), 8)
    bs_p = _round_up(bs, tm)
    # ... and keep >= 2 batch tiles when possible so the 'parallel' axis can
    # shard across v7x's two TensorCores.
    if bs_p // tm < 2 and tm >= 16:
        tm = _round_up(tm // 2, 8)
        bs_p = _round_up(bs, tm)
    n_row_tiles = bs_p // tm

    # x is padded only when needed and stays in its input dtype; the cast to
    # the matmul dtype happens inside the kernel instead of an extra HBM pass.
    if (bs_p - bs) or (in_dim_p - in_dim):
        x_in = jnp.pad(x, ((0, bs_p - bs), (0, in_dim_p - in_dim)))
    else:
        x_in = x
    x_itemsize = x_in.dtype.itemsize
    out_itemsize = jnp.dtype(out_dtype).itemsize

    resident = pl.Buffered(1)   # grid-invariant operands: single VMEM buffer

    cost = pl.CostEstimate(
        flops=2 * bs_p * (in_dim_p * n_hidden_p + n_hidden_p * out_dim_p),
        transcendentals=bs_p * out_dim_p,
        bytes_accessed=(bs_p * in_dim_p * x_itemsize
                        + (in_dim_p * n_hidden_p + n_hidden_p * out_dim_p) * w_itemsize
                        + (n_hidden_p + out_dim_p) * 4
                        + bs_p * out_dim_p * out_itemsize),
    )

    if k_steps == 1:
        kernel = _generator_kernel_resident
        grid = (n_row_tiles,)
        in_specs = [
            pl.BlockSpec((tm, in_dim_p), lambda i: (i, 0)),
            pl.BlockSpec((in_dim_p, n_hidden_p), lambda i: (0, 0), pipeline_mode=resident),
            pl.BlockSpec((1, n_hidden_p), lambda i: (0, 0), pipeline_mode=resident),
            pl.BlockSpec((n_hidden_p, out_dim_p), lambda i: (0, 0), pipeline_mode=resident),
            pl.BlockSpec((1, out_dim_p), lambda i: (0, 0), pipeline_mode=resident),
        ]
        out_specs = pl.BlockSpec((tm, out_dim_p), lambda i: (i, 0))
        scratch_shapes = []
        dims = ("parallel",)
        work_bytes = (2 * tm * in_dim_p * x_itemsize
                      + (in_dim_p * n_hidden_p + n_hidden_p * out_dim_p) * w_itemsize
                      + (n_hidden_p + out_dim_p) * 4
                      + 2 * tm * out_dim_p * out_itemsize
                      + tm * (n_hidden_p + out_dim_p) * 4)           # f32 temporaries
    else:
        kernel = _generator_kernel_ktiled
        grid = (n_row_tiles, k_steps)
        in_specs = [
            pl.BlockSpec((tm, tk), lambda i, k: (i, k)),
            pl.BlockSpec((tk, n_hidden_p), lambda i, k: (k, 0)),     # streamed over K
            pl.BlockSpec((1, n_hidden_p), lambda i, k: (0, 0), pipeline_mode=resident),
            pl.BlockSpec((n_hidden_p, out_dim_p), lambda i, k: (0, 0), pipeline_mode=resident),
            pl.BlockSpec((1, out_dim_p), lambda i, k: (0, 0), pipeline_mode=resident),
        ]
        out_specs = pl.BlockSpec((tm, out_dim_p), lambda i, k: (i, 0))
        scratch_shapes = [pltpu.VMEM((tm, n_hidden_p), jnp.float32)]
        dims = ("parallel", "arbitrary")
        work_bytes = (2 * tm * tk * x_itemsize
                      + 2 * tk * n_hidden_p * w_itemsize
                      + n_hidden_p * out_dim_p * w_itemsize
                      + (n_hidden_p + out_dim_p) * 4
                      + 2 * tm * out_dim_p * out_itemsize
                      + tm * n_hidden_p * 4                          # f32 hidden accumulator
                      + tm * (n_hidden_p + out_dim_p) * 4)           # f32 temporaries

    vmem_limit = min(max(int(work_bytes * 1.5) + (4 << 20), 16 << 20), 64 << 20)

    out_p = pl.pallas_call(
        kernel,
        out_shape=jax.ShapeDtypeStruct((bs_p, out_dim_p), out_dtype),
        grid=grid,
        in_specs=in_specs,
        out_specs=out_specs,
        scratch_shapes=scratch_shapes,
        compiler_params=pltpu.CompilerParams(
            dimension_semantics=dims,
            vmem_limit_bytes=vmem_limit,
        ),
        cost_estimate=cost,
    )(x_in, w1_p, b1_p, w2_p, b2_p)

    if bs_p == bs and out_dim_p == out_dim:
        return out_p
    return out_p[:bs, :out_dim]


def reference_forward(x, w1, b1, w2, b2):
    h = x @ w1 + b1
    h = jnp.where(h >= 0.0, h, 0.01 * h)
    return jnp.tanh(h @ w2 + b2)


if __name__ == "__main__":
    key = jax.random.PRNGKey(0)
    (kx, k1, k2, k3, k4,
     kx2, k5, k6, k7, k8) = jax.random.split(key, 10)

    # ---- test 1: small shapes, fully-resident-weights path -------------------
    bs, in_dim, n_hidden, out_dim = 4, 64, 32, 16
    x = jax.random.normal(kx, (bs, in_dim), dtype=jnp.float32)
    lim1 = 1.0 / jnp.sqrt(in_dim)
    lim2 = 1.0 / jnp.sqrt(n_hidden)
    w1 = jax.random.uniform(k1, (in_dim, n_hidden), jnp.float32, -lim1, lim1)
    b1 = jax.random.uniform(k2, (n_hidden,), jnp.float32, -lim1, lim1)
    w2 = jax.random.uniform(k3, (n_hidden, out_dim), jnp.float32, -lim2, lim2)
    b2 = jax.random.uniform(k4, (out_dim,), jnp.float32, -lim2, lim2)

    ref = reference_forward(x, w1, b1, w2, b2)

    # f32 matmul operands: tight match against the XLA reference (validation only).
    params_f32 = prepare_generator_params(w1, b1, w2, b2, matmul_dtype=jnp.float32)
    out_f32 = jax.block_until_ready(generator_forward(x, *params_f32, out_dim=out_dim))
    assert out_f32.shape == (bs, out_dim)
    assert jnp.allclose(out_f32, ref, atol=1e-5, rtol=1e-5), "f32 path mismatch"

    # bf16 matmul operands (production default: MXU-native, half the weight DMA).
    params_bf16 = prepare_generator_params(w1, b1, w2, b2, matmul_dtype=jnp.bfloat16)
    out_bf16 = jax.block_until_ready(generator_forward(x, *params_bf16, out_dim=out_dim))
    assert out_bf16.shape == (bs, out_dim)
    assert jnp.allclose(out_bf16, ref, atol=3e-2, rtol=3e-2), "bf16 path mismatch"

    # ---- test 2: force the K-tiled (w1-streaming) fallback path ---------------
    bs2, in2, hid2, out2 = 40, 300, 96, 48
    budget = 160_000   # too small for both f32 weights to stay resident -> k_steps > 1
    x2 = jax.random.normal(kx2, (bs2, in2), dtype=jnp.float32)
    l1 = 1.0 / jnp.sqrt(in2)
    l2 = 1.0 / jnp.sqrt(hid2)
    w1b = jax.random.uniform(k5, (in2, hid2), jnp.float32, -l1, l1)
    b1b = jax.random.uniform(k6, (hid2,), jnp.float32, -l1, l1)
    w2b = jax.random.uniform(k7, (hid2, out2), jnp.float32, -l2, l2)
    b2b = jax.random.uniform(k8, (out2,), jnp.float32, -l2, l2)

    ref2 = reference_forward(x2, w1b, b1b, w2b, b2b)
    params2 = prepare_generator_params(w1b, b1b, w2b, b2b, matmul_dtype=jnp.float32,
                                       weight_budget_bytes=budget)
    out2_k = jax.block_until_ready(
        generator_forward(x2, *params2, out_dim=out2, weight_budget_bytes=budget))
    assert out2_k.shape == (bs2, out2)
    assert jnp.allclose(out2_k, ref2, atol=1e-5, rtol=1e-5), "K-tiled path mismatch"

    print("KERNEL_OK")
</pallas_src>

<mosaic_0001>
module attributes {stable_mosaic.version = 11 : i64} {
  func.func @_generator_kernel_resident(%arg0: i32, %arg1: memref<8x128xf32, #tpu.memory_space<vmem>>, %arg2: memref<128x128xf32, #tpu.memory_space<vmem>>, %arg3: memref<1x128xf32, #tpu.memory_space<vmem>>, %arg4: memref<128x128xf32, #tpu.memory_space<vmem>>, %arg5: memref<1x128xf32, #tpu.memory_space<vmem>>, %arg6: memref<8x128xf32, #tpu.memory_space<vmem>>) attributes {dimension_semantics = [#tpu.dimension_semantics<parallel>], iteration_bounds = array<i64: 1>, scalar_prefetch = 0 : i64, scratch_operands = 0 : i64, tpu.core_type = #tpu.core_type<tc>, window_params = [{transform_indices = @transform_0, window_bounds = array<i64: 8, 128>}, {pipeline_mode = #tpu.pipeline_mode<synchronous>, transform_indices = @transform_1, window_bounds = array<i64: 128, 128>}, {pipeline_mode = #tpu.pipeline_mode<synchronous>, transform_indices = @transform_2, window_bounds = array<i64: 1, 128>}, {pipeline_mode = #tpu.pipeline_mode<synchronous>, transform_indices = @transform_3, window_bounds = array<i64: 128, 128>}, {pipeline_mode = #tpu.pipeline_mode<synchronous>, transform_indices = @transform_4, window_bounds = array<i64: 1, 128>}, {transform_indices = @transform_5, window_bounds = array<i64: 8, 128>}]} {
    %c0 = arith.constant 0 : index
    %c0_0 = arith.constant 0 : index
    %0 = vector.load %arg1[%c0, %c0_0] : memref<8x128xf32, #tpu.memory_space<vmem>>, vector<8x128xf32>
    %c0_1 = arith.constant 0 : index
    %c0_2 = arith.constant 0 : index
    %1 = vector.load %arg2[%c0_1, %c0_2] : memref<128x128xf32, #tpu.memory_space<vmem>>, vector<128x128xf32>
    %cst = arith.constant dense<0.000000e+00> : vector<8x128xf32>
    %2 = tpu.matmul %0, %1, %cst {dimension_numbers = #tpu.dot_dimension_numbers<[1], [0], [0], [1], [0, 0, 1, 1], [], []>} : vector<8x128xf32>, vector<128x128xf32>, vector<8x128xf32> -> vector<8x128xf32>
    %c0_3 = arith.constant 0 : index
    %c0_4 = arith.constant 0 : index
    %3 = vector.load %arg3[%c0_3, %c0_4] : memref<1x128xf32, #tpu.memory_space<vmem>>, vector<1x128xf32>
    %4 = vector.broadcast %3 : vector<1x128xf32> to vector<8x128xf32>
    %5 = arith.addf %2, %4 : vector<8x128xf32>
    %cst_5 = arith.constant 0.000000e+00 : f32
    %6 = vector.broadcast %cst_5 : f32 to vector<8x128xf32>
    %7 = arith.cmpf oge, %5, %6 : vector<8x128xf32>
    %cst_6 = arith.constant 0.00999999977 : f32
    %8 = vector.broadcast %cst_6 : f32 to vector<8x128xf32>
    %9 = arith.mulf %8, %5 : vector<8x128xf32>
    %10 = arith.select %7, %5, %9 : vector<8x128xi1>, vector<8x128xf32>
    %c0_7 = arith.constant 0 : index
    %c0_8 = arith.constant 0 : index
    %11 = vector.load %arg4[%c0_7, %c0_8] : memref<128x128xf32, #tpu.memory_space<vmem>>, vector<128x128xf32>
    %cst_9 = arith.constant dense<0.000000e+00> : vector<8x128xf32>
    %12 = tpu.matmul %10, %11, %cst_9 {dimension_numbers = #tpu.dot_dimension_numbers<[1], [0], [0], [1], [0, 0, 1, 1], [], []>} : vector<8x128xf32>, vector<128x128xf32>, vector<8x128xf32> -> vector<8x128xf32>
    %c0_10 = arith.constant 0 : index
    %c0_11 = arith.constant 0 : index
    %13 = vector.load %arg5[%c0_10, %c0_11] : memref<1x128xf32, #tpu.memory_space<vmem>>, vector<1x128xf32>
    %14 = vector.broadcast %13 : vector<1x128xf32> to vector<8x128xf32>
    %15 = arith.addf %12, %14 : vector<8x128xf32>
    %16 = math.tanh %15 : vector<8x128xf32>
    %c0_12 = arith.constant 0 : index
    %c0_13 = arith.constant 0 : index
    %17 = vector.load %arg6[%c0_12, %c0_13] : memref<8x128xf32, #tpu.memory_space<vmem>>, vector<8x128xf32>
    tpu.vector_store %arg6[%c0_12, %c0_13], %16 {strides = array<i32>} : memref<8x128xf32, #tpu.memory_space<vmem>>, vector<8x128xf32>,
    return
  }
  func.func @transform_0(%arg0: i32) -> (i32, i32) {
    %c0_i32 = arith.constant 0 : i32
    %c0_i32_0 = arith.constant 0 : i32
    return %arg0, %c0_i32 : i32, i32
  }
  func.func @transform_1(%arg0: i32) -> (i32, i32) {
    %c0_i32 = arith.constant 0 : i32
    %c0_i32_0 = arith.constant 0 : i32
    %c0_i32_1 = arith.constant 0 : i32
    return %c0_i32, %c0_i32_0 : i32, i32
  }
  func.func @transform_2(%arg0: i32) -> (i32, i32) {
    %c0_i32 = arith.constant 0 : i32
    %c0_i32_0 = arith.constant 0 : i32
    %c0_i32_1 = arith.constant 0 : i32
    return %c0_i32, %c0_i32_0 : i32, i32
  }
  func.func @transform_3(%arg0: i32) -> (i32, i32) {
    %c0_i32 = arith.constant 0 : i32
    %c0_i32_0 = arith.constant 0 : i32
    %c0_i32_1 = arith.constant 0 : i32
    return %c0_i32, %c0_i32_0 : i32, i32
  }
  func.func @transform_4(%arg0: i32) -> (i32, i32) {
    %c0_i32 = arith.constant 0 : i32
    %c0_i32_0 = arith.constant 0 : i32
    %c0_i32_1 = arith.constant 0 : i32
    return %c0_i32, %c0_i32_0 : i32, i32
  }
  func.func @transform_5(%arg0: i32) -> (i32, i32) {
    %c0_i32 = arith.constant 0 : i32
    %c0_i32_0 = arith.constant 0 : i32
    return %arg0, %c0_i32 : i32, i32
  }
}

</mosaic_0001>

<llo_original>
// kernel: generator_forward.1
$region0: #{generator_forward.1}
  #allocation0 [shape = 'u32[]', space=smem, size = 0x4, offset = 0x4, fixed_abs, tag = 'smem constant byte address 0x4 - core index']
  #allocation1 [shape = 'u32[144,128]{1,0:T(1,128)}', space=vmem, size = 0x12000, scoped, tag = 'internal scratch']
  %s0 = inlined_call_operand.vmem [shape: f32[8,128], index: 0, kind: input, shape index: {}]
  %s1 = inlined_call_operand.hbm [shape: f32[128,128], index: 1, kind: input, shape index: {}]
  %s2 = inlined_call_operand.vmem [shape: f32[1,128], index: 2, kind: input, shape index: {}]
  %s3 = inlined_call_operand.hbm [shape: f32[128,128], index: 3, kind: input, shape index: {}]
  %s4 = inlined_call_operand.vmem [shape: f32[1,128], index: 4, kind: input, shape index: {}]
  %s5 = inlined_call_operand.vmem [shape: f32[8,128], index: 5, kind: output, shape index: {}]
  %s6 = sld [smem:[#allocation0]]
  $region38: #{generator_forward.1} parent=0
    _
  %s8 = ssub.s32 1, %s6
  %s9 = scalar_select 0, %s8, %s6
  $region1: #{generator_forward.1} parent=0
    #allocation2 [shape = 'u8[65536]{0}', space=vmem, size = 0x10000, scoped, tag = 'input window, operand 1, single buffered']
    #allocation3 [shape = 's32[1]{0}', space=sflag, size = 0x4, scoped, tag = 'scoped memory for generator_forward.1']
    #allocation4 [shape = 'u8[65536]{0}', space=vmem, size = 0x10000, scoped, tag = 'input window, operand 3, single buffered']
    #allocation5 [shape = 's32[1]{0}', space=sflag, size = 0x4, scoped, tag = 'scoped memory for generator_forward.1']
    %10 = vsyncpa [#allocation3], 0
    %11 = vsyncpa [#allocation5], 0
    // Predicated region
    $region2: #{generator_forward.1} parent=1 // pred_check
      _
    $region3: #{generator_forward.1} parent=1 // pred_check_branch
      %13 = sbr.rel (0) target = $region5
    $region4: #{generator_forward.1} parent=1 // pred_region
      _
    $region5: #{generator_forward.1} parent=1 // pred_fallthru
      _
    // Predicated region
    $region6: #{generator_forward.1} parent=1 // pred_check
      _
    $region7: #{generator_forward.1} parent=1 // pred_check_branch
      %15 = sbr.rel (0) target = $region9
    $region8: #{generator_forward.1} parent=1 // pred_region
      %s17 = ssub.s32 2048, 2048
      %18 = vsyncadd [#allocation3], %s17
      %s19 = sshll.u32 [#allocation2], 4
      %s20 = int_to_ptr.vmem [resolvable:$true] %s19
      %25 = dma.hbm_to_vmem [thread:$0]  %s1, 2048, %s20, [#allocation3], 128, 128, 8
    $region9: #{generator_forward.1} parent=1 // pred_fallthru
      _
    // Predicated region
    $region10: #{generator_forward.1} parent=1 // pred_check
      _
    $region11: #{generator_forward.1} parent=1 // pred_check_branch
      %27 = sbr.rel (0) target = $region13
    $region12: #{generator_forward.1} parent=1 // pred_region
      _
    $region13: #{generator_forward.1} parent=1 // pred_fallthru
      _
    // Predicated region
    $region14: #{generator_forward.1} parent=1 // pred_check
      _
    $region15: #{generator_forward.1} parent=1 // pred_check_branch
      %29 = sbr.rel (0) target = $region17
    $region16: #{generator_forward.1} parent=1 // pred_region
      %s31 = ssub.s32 2048, 2048
      %32 = vsyncadd [#allocation5], %s31
      %s33 = sshll.u32 [#allocation4], 4
      %s34 = int_to_ptr.vmem [resolvable:$true] %s33
      %39 = dma.hbm_to_vmem [thread:$0]  %s3, 2048, %s34, [#allocation5], 128, 128, 8
    $region17: #{generator_forward.1} parent=1 // pred_fallthru
      _
    // Predicated region
    $region18: #{generator_forward.1} parent=1 // pred_check
      _
    $region19: #{generator_forward.1} parent=1 // pred_check_branch
      %41 = sbr.rel (0) target = $region21
    $region20: #{generator_forward.1} parent=1 // pred_region
      _
    $region21: #{generator_forward.1} parent=1 // pred_fallthru
      _
    // Predicated region
    $region22: #{generator_forward.1} parent=1 // pred_check
      _
    $region23: #{generator_forward.1} parent=1 // pred_check_branch
      %43 = sbr.rel (0) target = $region25
    $region24: #{generator_forward.1} parent=1 // pred_region
      %44 = dma.done [#allocation3], 2048
    $region25: #{generator_forward.1} parent=1 // pred_fallthru
      _
    // Predicated region
    $region26: #{generator_forward.1} parent=1 // pred_check
      _
    $region27: #{generator_forward.1} parent=1 // pred_check_branch
      %46 = sbr.rel (0) target = $region29
    $region28: #{generator_forward.1} parent=1 // pred_region
      %47 = dma.done [#allocation5], 2048
    $region29: #{generator_forward.1} parent=1 // pred_fallthru
      _
    %v48 = vld [vmem:[%s0] sm:$0xff]
    %v49 = vld [vmem:[#allocation2] sm:$0xff]
    %v50 = vld [vmem:[#allocation2 + $0x8] sm:$0xff]
    %v51 = vld [vmem:[#allocation2 + $0x10] sm:$0xff]
    %v52 = vld [vmem:[#allocation2 + $0x18] sm:$0xff]
    %v53 = vld [vmem:[#allocation2 + $0x20] sm:$0xff]
    %v54 = vld [vmem:[#allocation2 + $0x28] sm:$0xff]
    %v55 = vld [vmem:[#allocation2 + $0x30] sm:$0xff]
    %v56 = vld [vmem:[#allocation2 + $0x38] sm:$0xff]
    %v57 = vld [vmem:[#allocation2 + $0x40] sm:$0xff]
    %v58 = vld [vmem:[#allocation2 + $0x48] sm:$0xff]
    %v59 = vld [vmem:[#allocation2 + $0x50] sm:$0xff]
    %v60 = vld [vmem:[#allocation2 + $0x58] sm:$0xff]
    %v61 = vld [vmem:[#allocation2 + $0x60] sm:$0xff]
    %v62 = vld [vmem:[#allocation2 + $0x68] sm:$0xff]
    %v63 = vld [vmem:[#allocation2 + $0x70] sm:$0xff]
    %v64 = vld [vmem:[#allocation2 + $0x78] sm:$0xff]
    %v65 = vld [vmem:[%s2] sm:$0x1]
    %v67 = vlaneseq
    %v68 = vshrl.u32 %v67, 7
    %v69 = vsub.s32 0, %v68
    %v70 = vrot.slane %v65, %v69
    %72 = vmatprep.subr.mxu0 0.0
    %73 = vmatpush1.msra.mxu0 %v49
    %74 = vmatprep.subr.mxu0 0.0
    %75 = vmatpush1.msra.mxu0 %v50
    %76 = vmatprep.subr.mxu0 0.0
    %77 = vmatpush1.msra.mxu0 %v51
    %78 = vmatprep.subr.mxu0 0.0
    %79 = vmatpush1.msra.mxu0 %v52
    %80 = vmatprep.subr.mxu0 0.0
    %81 = vmatpush1.msra.mxu0 %v53
    %82 = vmatprep.subr.mxu0 0.0
    %83 = vmatpush1.msra.mxu0 %v54
    %84 = vmatprep.subr.mxu0 0.0
    %85 = vmatpush1.msra.mxu0 %v55
    %86 = vmatprep.subr.mxu0 0.0
    %87 = vmatpush1.msra.mxu0 %v56
    %88 = vmatprep.subr.mxu0 0.0
    %89 = vmatpush1.msra.mxu0 %v57
    %90 = vmatprep.subr.mxu0 0.0
    %91 = vmatpush1.msra.mxu0 %v58
    %92 = vmatprep.subr.mxu0 0.0
    %93 = vmatpush1.msra.mxu0 %v59
    %94 = vmatprep.subr.mxu0 0.0
    %95 = vmatpush1.msra.mxu0 %v60
    %96 = vmatprep.subr.mxu0 0.0
    %97 = vmatpush1.msra.mxu0 %v61
    %98 = vmatprep.subr.mxu0 0.0
    %99 = vmatpush1.msra.mxu0 %v62
    %100 = vmatprep.subr.mxu0 0.0
    %101 = vmatpush1.msra.mxu0 %v63
    %102 = vmatprep.subr.mxu0 0.0
    %103 = vmatpush1.msra.mxu0 %v64
    %104 = vmatprep.subr.mxu0 0.0
    %105 = vmatpush1.msra.mxu0 0.0
    %106 = vmatprep.subr.mxu0 0.0
    %107 = vmatpush1.msra.mxu0 0.0
    %108 = vmatprep.subr.mxu0 0.0
    %109 = vmatpush1.msra.mxu0 0.0
    %110 = vmatprep.subr.mxu0 0.0
    %111 = vmatpush1.msra.mxu0 0.0
    %112 = vmatprep.subr.mxu0 0.0
    %113 = vmatpush1.msra.mxu0 0.0
    %114 = vmatprep.subr.mxu0 0.0
    %115 = vmatpush1.msra.mxu0 0.0
    %116 = vmatprep.subr.mxu0 0.0
    %117 = vmatpush1.msra.mxu0 0.0
    %118 = vmatprep.subr.mxu0 0.0
    %119 = vmatpush1.msra.mxu0 0.0
    %120 = vmatprep.subr.mxu0 0.0
    %121 = vmatpush1.msra.mxu0 0.0
    %122 = vmatprep.subr.mxu0 0.0
    %123 = vmatpush1.msra.mxu0 0.0
    %124 = vmatprep.subr.mxu0 0.0
    %125 = vmatpush1.msra.mxu0 0.0
    %126 = vmatprep.subr.mxu0 0.0
    %127 = vmatpush1.msra.mxu0 0.0
    %128 = vmatprep.subr.mxu0 0.0
    %129 = vmatpush1.msra.mxu0 0.0
    %130 = vmatprep.subr.mxu0 0.0
    %131 = vmatpush1.msra.mxu0 0.0
    %132 = vmatprep.subr.mxu0 0.0
    %133 = vmatpush1.msra.mxu0 0.0
    %134 = vmatprep.subr.mxu0 0.0
    %135 = vmatpush1.msra.mxu0 0.0
    %136 = vmatprep.mubr.f32.mxu0 0.0
    %137 = vmatmul.mubr.f32.gmra.mrb[0].mxu0 %v48
    %v138 = vpop.f32.mrb[0].mxu0
    %v139 = vadd.f32 %v70, %v138
    %v140 = vpop.f32.mrb[0].mxu0
    %141 = vdwg.mxu0
    %vm142 = vcmp.ge.f32.partialorder %v139, 0.0
    %v143 = vmul.f32 %v139, 0.01
    %v144 = vsel %vm142, %v139, %v143
    %v145 = vld [vmem:[#allocation4] sm:$0xff]
    %v146 = vld [vmem:[#allocation4 + $0x8] sm:$0xff]
    %v147 = vld [vmem:[#allocation4 + $0x10] sm:$0xff]
    %v148 = vld [vmem:[#allocation4 + $0x18] sm:$0xff]
    %v149 = vld [vmem:[#allocation4 + $0x20] sm:$0xff]
    %v150 = vld [vmem:[#allocation4 + $0x28] sm:$0xff]
    %v151 = vld [vmem:[#allocation4 + $0x30] sm:$0xff]
    %v152 = vld [vmem:[#allocation4 + $0x38] sm:$0xff]
    %v153 = vld [vmem:[#allocation4 + $0x40] sm:$0xff]
    %v154 = vld [vmem:[#allocation4 + $0x48] sm:$0xff]
    %v155 = vld [vmem:[#allocation4 + $0x50] sm:$0xff]
    %v156 = vld [vmem:[#allocation4 + $0x58] sm:$0xff]
    %v157 = vld [vmem:[#allocation4 + $0x60] sm:$0xff]
    %v158 = vld [vmem:[#allocation4 + $0x68] sm:$0xff]
    %v159 = vld [vmem:[#allocation4 + $0x70] sm:$0xff]
    %v160 = vld [vmem:[#allocation4 + $0x78] sm:$0xff]
    %v161 = vld [vmem:[%s4] sm:$0x1]
    %v163 = vlaneseq
    %v164 = vshrl.u32 %v163, 7
    %v165 = vsub.s32 0, %v164
    %v166 = vrot.slane %v161, %v165
    %168 = vmatprep.subr.mxu0 0.0
    %169 = vmatpush1.msra.mxu0 %v145
    %170 = vmatprep.subr.mxu0 0.0
    %171 = vmatpush1.msra.mxu0 %v146
    %172 = vmatprep.subr.mxu0 0.0
    %173 = vmatpush1.msra.mxu0 %v147
    %174 = vmatprep.subr.mxu0 0.0
    %175 = vmatpush1.msra.mxu0 %v148
    %176 = vmatprep.subr.mxu0 0.0
    %177 = vmatpush1.msra.mxu0 %v149
    %178 = vmatprep.subr.mxu0 0.0
    %179 = vmatpush1.msra.mxu0 %v150
    %180 = vmatprep.subr.mxu0 0.0
    %181 = vmatpush1.msra.mxu0 %v151
    %182 = vmatprep.subr.mxu0 0.0
    %183 = vmatpush1.msra.mxu0 %v152
    %184 = vmatprep.subr.mxu0 0.0
    %185 = vmatpush1.msra.mxu0 %v153
    %186 = vmatprep.subr.mxu0 0.0
    %187 = vmatpush1.msra.mxu0 %v154
    %188 = vmatprep.subr.mxu0 0.0
    %189 = vmatpush1.msra.mxu0 %v155
    %190 = vmatprep.subr.mxu0 0.0
    %191 = vmatpush1.msra.mxu0 %v156
    %192 = vmatprep.subr.mxu0 0.0
    %193 = vmatpush1.msra.mxu0 %v157
    %194 = vmatprep.subr.mxu0 0.0
    %195 = vmatpush1.msra.mxu0 %v158
    %196 = vmatprep.subr.mxu0 0.0
    %197 = vmatpush1.msra.mxu0 %v159
    %198 = vmatprep.subr.mxu0 0.0
    %199 = vmatpush1.msra.mxu0 %v160
    %200 = vmatprep.subr.mxu0 0.0
    %201 = vmatpush1.msra.mxu0 0.0
    %202 = vmatprep.subr.mxu0 0.0
    %203 = vmatpush1.msra.mxu0 0.0
    %204 = vmatprep.subr.mxu0 0.0
    %205 = vmatpush1.msra.mxu0 0.0
    %206 = vmatprep.subr.mxu0 0.0
    %207 = vmatpush1.msra.mxu0 0.0
    %208 = vmatprep.subr.mxu0 0.0
    %209 = vmatpush1.msra.mxu0 0.0
    %210 = vmatprep.subr.mxu0 0.0
    %211 = vmatpush1.msra.mxu0 0.0
    %212 = vmatprep.subr.mxu0 0.0
    %213 = vmatpush1.msra.mxu0 0.0
    %214 = vmatprep.subr.mxu0 0.0
    %215 = vmatpush1.msra.mxu0 0.0
    %216 = vmatprep.subr.mxu0 0.0
    %217 = vmatpush1.msra.mxu0 0.0
    %218 = vmatprep.subr.mxu0 0.0
    %219 = vmatpush1.msra.mxu0 0.0
    %220 = vmatprep.subr.mxu0 0.0
    %221 = vmatpush1.msra.mxu0 0.0
    %222 = vmatprep.subr.mxu0 0.0
    %223 = vmatpush1.msra.mxu0 0.0
    %224 = vmatprep.subr.mxu0 0.0
    %225 = vmatpush1.msra.mxu0 0.0
    %226 = vmatprep.subr.mxu0 0.0
    %227 = vmatpush1.msra.mxu0 0.0
    %228 = vmatprep.subr.mxu0 0.0
    %229 = vmatpush1.msra.mxu0 0.0
    %230 = vmatprep.subr.mxu0 0.0
    %231 = vmatpush1.msra.mxu0 0.0
    %232 = vmatprep.mubr.f32.mxu0 0.0
    %233 = vmatmul.mubr.f32.gmra.mrb[0].mxu0 %v144
    %v234 = vpop.f32.mrb[0].mxu0
    %v235 = vadd.f32 %v166, %v234
    %v236 = vpop.f32.mrb[0].mxu0
    %237 = vdwg.mxu0
    %v238 = vtanh.pop %v235
    %239 = vst [vmem:[%s5] sm:$0xff] %v238
    // Predicated region
    $region30: #{generator_forward.1} parent=1 // pred_check
      _
    $region31: #{generator_forward.1} parent=1 // pred_check_branch
      %241 = sbr.rel (0) target = $region33
    $region32: #{generator_forward.1} parent=1 // pred_region
      _
    $region33: #{generator_forward.1} parent=1 // pred_fallthru
      _
    // Predicated region
    $region34: #{generator_forward.1} parent=1 // pred_check
      _
    $region35: #{generator_forward.1} parent=1 // pred_check_branch
      %243 = sbr.rel (0) target = $region37
    $region36: #{generator_forward.1} parent=1 // pred_region
      _
    $region37: #{generator_forward.1} parent=1 // pred_fallthru
      _
    %244 = vsyncpa [#allocation3], 1
    %245 = vsyncpa [#allocation5], 1

</llo_original>
